<compile_context>
chip_gen: v7x
topology: tpu7x:2x2x1
jax: 0.10.0
libtpu: 0.0.40
codegen_flags: <defaults>
</compile_context>

<pallas_src>
import jax
import jax.numpy as jnp
from jax.experimental import pallas as pl
from jax.experimental.pallas import tpu as pltpu


def _identity_kernel(x_ref, o_ref):
    # BaseModel "forward": nothing to compute — pass the tile through.
    o_ref[...] = x_ref[...]


# Widest lane-dense widths to try (all large multiples of 128).
_LANE_WIDTH_CANDIDATES = (8192, 4096, 2048, 1024, 512, 256, 128)
# ~4 MiB per tile: input+output double-buffered => ~16 MiB resident, safe on
# v5e (scoped default raised explicitly below), v6e (32 MiB), v7x (32/64 MiB).
_TARGET_TILE_BYTES = 4 * 1024 * 1024


def _pick_cols(total: int) -> int:
    """Widest lane-dense width (multiple of 128) that divides the element count."""
    for c in _LANE_WIDTH_CANDIDATES:
        if total % c == 0:
            return c
    # Totals not divisible by 128 fall back to one full-extent block (layout-exempt);
    # fine for small tensors.
    return total


def _pick_row_tile(rows: int, cols: int, itemsize: int, sublane_mult: int) -> int:
    """Row-tile: ~_TARGET_TILE_BYTES per block, multiple of the sublane granularity,
    preferring an even divisor of `rows` so no block is ragged (no masked stores)."""
    target_rows = max(1, _TARGET_TILE_BYTES // (cols * itemsize))
    if target_rows >= rows:
        return rows  # single block along rows; full-extent dim is layout-exempt
    # Prefer an even divisor of rows that is a multiple of sublane_mult.
    t = (target_rows // sublane_mult) * sublane_mult
    while t >= sublane_mult:
        if rows % t == 0:
            return t
        t -= sublane_mult
    # Fallback: ragged last block (Pallas masks it correctly; only a minor perf hit).
    return max(sublane_mult, (target_rows // sublane_mult) * sublane_mult)


def base_model_forward(x: jax.Array) -> jax.Array:
    """Identity forward (BaseModel.forward is abstract) as a Pallas TPU copy kernel.

    Accepts any tensor (e.g. NCHW); returns an identical tensor. No padding, no
    post-slice: the tensor is flattened to a lane-dense 2-D slab and copied with
    large tiles that map cleanly onto the (8, 128) vreg layout.
    """
    orig_shape = x.shape
    total = int(x.size)
    itemsize = jnp.dtype(x.dtype).itemsize
    # Sublane granularity: 8 rows for 32-bit dtypes, 16 for 16-bit, 32 for 8-bit.
    sublane_mult = 8 * max(1, 4 // itemsize)

    cols = _pick_cols(total)
    rows = total // cols
    x2 = x.reshape(rows, cols)

    tr = _pick_row_tile(rows, cols, itemsize, sublane_mult)
    grid = (pl.cdiv(rows, tr),)

    out = pl.pallas_call(
        _identity_kernel,
        out_shape=jax.ShapeDtypeStruct((rows, cols), x.dtype),
        grid_spec=pltpu.PrefetchScalarGridSpec(
            num_scalar_prefetch=0,
            grid=grid,
            in_specs=[pl.BlockSpec((tr, cols), lambda i: (i, 0))],
            out_specs=pl.BlockSpec((tr, cols), lambda i: (i, 0)),
        ),
        # True identity: let the output HBM buffer alias the input buffer.
        input_output_aliases={0: 0},
        compiler_params=pltpu.CompilerParams(
            dimension_semantics=("parallel",),  # megacore-shardable on v7x
            vmem_limit_bytes=32 * 1024 * 1024,
        ),
    )(x2)

    # No dtype cast (dtype never changes), no un-padding slice needed.
    return out.reshape(orig_shape)


if __name__ == "__main__":
    key = jax.random.PRNGKey(0)
    # Small NCHW input consistent with a segmentation-model style tensor.
    x = jax.random.normal(key, (2, 4, 16, 16), dtype=jnp.float32)

    y = base_model_forward(x)
    y = jax.block_until_ready(y)

    assert y.shape == x.shape, (y.shape, x.shape)
    assert y.dtype == x.dtype
    assert bool(jnp.array_equal(y, x)), "identity forward mismatch"

    print("KERNEL_OK")
</pallas_src>

<mosaic_0001>
module attributes {stable_mosaic.version = 11 : i64} {
  func.func @_identity_kernel(%arg0: i32, %arg1: memref<1x2048xf32, #tpu.memory_space<vmem>>, %arg2: memref<1x2048xf32, #tpu.memory_space<vmem>>) attributes {dimension_semantics = [#tpu.dimension_semantics<parallel>], iteration_bounds = array<i64: 1>, scalar_prefetch = 0 : i64, scratch_operands = 0 : i64, tpu.core_type = #tpu.core_type<tc>, window_params = [{transform_indices = @transform_0, window_bounds = array<i64: 1, 2048>}, {transform_indices = @transform_1, window_bounds = array<i64: 1, 2048>}]} {
    %c0 = arith.constant 0 : index
    %c0_0 = arith.constant 0 : index
    %0 = vector.load %arg1[%c0, %c0_0] : memref<1x2048xf32, #tpu.memory_space<vmem>>, vector<1x2048xf32>
    %c0_1 = arith.constant 0 : index
    %c0_2 = arith.constant 0 : index
    %1 = vector.load %arg2[%c0_1, %c0_2] : memref<1x2048xf32, #tpu.memory_space<vmem>>, vector<1x2048xf32>
    tpu.vector_store %arg2[%c0_1, %c0_2], %0 {strides = array<i32>} : memref<1x2048xf32, #tpu.memory_space<vmem>>, vector<1x2048xf32>,
    return
  }
  func.func @transform_0(%arg0: i32) -> (i32, i32) {
    %c0_i32 = arith.constant 0 : i32
    %c0_i32_0 = arith.constant 0 : i32
    return %arg0, %c0_i32 : i32, i32
  }
  func.func @transform_1(%arg0: i32) -> (i32, i32) {
    %c0_i32 = arith.constant 0 : i32
    %c0_i32_0 = arith.constant 0 : i32
    return %arg0, %c0_i32 : i32, i32
  }
}

</mosaic_0001>

<llo_original>
// kernel: tpu_custom_call.1
$region0: #{tpu_custom_call.1}
  #allocation0 [shape = 'u32[]', space=smem, size = 0x4, offset = 0x4, fixed_abs, tag = 'smem constant byte address 0x4 - core index']
  #allocation1 [shape = 'u32[144,128]{1,0:T(1,128)}', space=vmem, size = 0x12000, scoped, tag = 'internal scratch']
  %s0 = inlined_call_operand.hbm [shape: f32[1,2048], index: 0, kind: input, shape index: {}, may-alias: {0,1}]
  %s1 = inlined_call_operand.hbm [shape: f32[1,2048], index: 1, kind: output, shape index: {}, may-alias: {0,1}]
  %s2 = sld [smem:[#allocation0]]
  $region18: #{tpu_custom_call.1} parent=0
    _
  %s4 = ssub.s32 1, %s2
  %s5 = scalar_select 0, %s4, %s2
  $region1: #{tpu_custom_call.1} parent=0
    #allocation2 [shape = 'u8[8192]{0}', space=vmem, size = 0x2000, scoped, tag = 'input window, operand 0, single buffered']
    #allocation3 [shape = 's32[1]{0}', space=sflag, size = 0x4, scoped, tag = 'scoped memory for tpu_custom_call.1']
    #allocation4 [shape = 's32[1]{0}', space=sflag, size = 0x4, scoped, tag = 'scoped memory for tpu_custom_call.1']
    #allocation5 [shape = 'u8[8192]{0}', space=vmem, size = 0x2000, scoped, tag = 'output window, operand 0, single buffered']
    %6 = vsyncpa [#allocation3], 0
    %7 = vsyncpa [#allocation4], 0
    // Predicated region
    $region2: #{tpu_custom_call.1} parent=1 // pred_check
      _
    $region3: #{tpu_custom_call.1} parent=1 // pred_check_branch
      %9 = sbr.rel (0) target = $region5
    $region4: #{tpu_custom_call.1} parent=1 // pred_region
      %s11 = ssub.s32 256, 256
      %12 = vsyncadd [#allocation3], %s11
      %s14 = sshll.u32 [#allocation2], 4
      %s15 = int_to_ptr.vmem [resolvable:$true] %s14
      %17 = dma.hbm_to_vmem [thread:$0]  %s0, 256, %s15, [#allocation3]
    $region5: #{tpu_custom_call.1} parent=1 // pred_fallthru
      _
    // Predicated region
    $region6: #{tpu_custom_call.1} parent=1 // pred_check
      _
    $region7: #{tpu_custom_call.1} parent=1 // pred_check_branch
      %19 = sbr.rel (0) target = $region9
    $region8: #{tpu_custom_call.1} parent=1 // pred_region
      %20 = dma.done [#allocation3], 256
    $region9: #{tpu_custom_call.1} parent=1 // pred_fallthru
      _
    %v21 = vld [vmem:[#allocation2] sm:$0xff]
    %v22 = vld [vmem:[#allocation2 + $0x8] sm:$0xff]
    %23 = vst [vmem:[#allocation5] sm:$0xff] %v21
    %24 = vst [vmem:[#allocation5 + $0x8] sm:$0xff] %v22
    // Predicated region
    $region10: #{tpu_custom_call.1} parent=1 // pred_check
      _
    $region11: #{tpu_custom_call.1} parent=1 // pred_check_branch
      %26 = sbr.rel (0) target = $region13
    $region12: #{tpu_custom_call.1} parent=1 // pred_region
      %s28 = ssub.s32 256, 256
      %29 = vsyncadd [#allocation4], %s28
      %s31 = sshll.u32 [#allocation5], 4
      %s32 = int_to_ptr.vmem [resolvable:$true] %s31
      %34 = dma.vmem_to_hbm [thread:$0]  %s32, 256, %s1, [#allocation4]
    $region13: #{tpu_custom_call.1} parent=1 // pred_fallthru
      _
    // Predicated region
    $region14: #{tpu_custom_call.1} parent=1 // pred_check
      _
    $region15: #{tpu_custom_call.1} parent=1 // pred_check_branch
      %36 = sbr.rel (0) target = $region17
    $region16: #{tpu_custom_call.1} parent=1 // pred_region
      %37 = dma.done [#allocation4], 256
    $region17: #{tpu_custom_call.1} parent=1 // pred_fallthru
      _
    %38 = vsyncpa [#allocation3], 1
    %39 = vsyncpa [#allocation4], 1

</llo_original>
